<compile_context>
chip_gen: v6e
topology: v6e:2x2x1
jax: 0.10.0
libtpu: 0.0.40
codegen_flags: <defaults>
</compile_context>

<pallas_src>
import jax
import jax.numpy as jnp
from jax.experimental import pallas as pl
from jax.experimental.pallas import tpu as pltpu

MARGIN = 1.0


def transr_dist_kernel(mt_ref, rid_ref, h_ref, t_ref, r_ref, out_ref):
    """Computes ||(h - t) @ M[rid] + r||_2 for one lane-dense batch tile.

    mt_ref  : (R*D, D) stacked transposed projection matrices (M[r].T), resident
    rid_ref : (1, TB)  int32 relation id per column
    h/t/r   : (D, TB)  gathered embeddings, batch on the 128-lane axis
    out_ref : (1, TB)  per-column L2 distance (lane-dense)
    """
    D = h_ref.shape[0]
    R = mt_ref.shape[0] // D
    f32 = jnp.float32

    # ||h@M + r - t@M|| == ||(h - t)@M + r||   (matmul is linear)
    d = (h_ref[...] - t_ref[...]).astype(f32)                       # (D, TB)

    # One long matmul instead of R (or 2R) tiny D-row matmuls.
    proj_all = jnp.dot(mt_ref[...].astype(f32), d,
                       preferred_element_type=jnp.float32)          # (R*D, TB)

    # Each column matches exactly one relation -> select (1 op/elem), no mask MAC.
    rid = rid_ref[...]                                               # (1, TB)
    proj = jnp.zeros_like(d)
    for r in range(R):
        proj = jnp.where(rid == r, proj_all[r * D:(r + 1) * D, :], proj)

    diff = proj + r_ref[...].astype(f32)                             # (D, TB)
    # Batched squared-sum over D (sublane/XLU reduce) -> lane-dense (1, TB).
    out_ref[...] = jnp.sqrt(jnp.sum(diff * diff, axis=0, keepdims=True))


def _pick_batch_tile(total, D):
    """total is a multiple of 256 (2 * padded batch); pick a lane-dense tile."""
    # Keep ~4 live (D, TB) f32 arrays within the vreg/VMEM sweet spot.
    cap = max(128, min(512, (16384 // max(D, 1)) // 128 * 128))
    cands = [c for c in (512, 256, 128) if c <= cap and total % c == 0]
    for c in cands:
        if total // c >= 2:        # >= 2 tiles: pipelining + v7x 2-TC split
            return c
    return cands[0] if cands else 128


def transr_loss(pos_triples, neg_triples, entity_emb, relation_emb, proj_matrix):
    """pos/neg_triples: int32 [B, 3], columns = (head, tail, relation)."""
    B = pos_triples.shape[0]
    R, D, _ = proj_matrix.shape
    B_pad = ((B + 127) // 128) * 128

    h_pos, t_pos, r_pos = pos_triples[:, 0], pos_triples[:, 1], pos_triples[:, 2]
    h_neg, t_neg, r_neg = neg_triples[:, 0], neg_triples[:, 1], neg_triples[:, 2]

    pad = lambda x: jnp.pad(x, (0, B_pad - B))
    # Fused stream: columns [0, B_pad) = positives, [B_pad, 2*B_pad) = negatives.
    h_all = jnp.concatenate([pad(h_pos), pad(h_neg)])
    t_all = jnp.concatenate([pad(t_pos), pad(t_neg)])
    r_all = jnp.concatenate([pad(r_pos), pad(r_neg)])

    # Embedding-row gathers stay in plain JAX (data-dependent gather);
    # transposes put batch on the 128-lane axis (layout plumbing only).
    h_e = entity_emb[h_all].T                 # (D, 2*B_pad)
    t_e = entity_emb[t_all].T
    r_e = relation_emb[r_all].T
    rid = r_all.astype(jnp.int32)[None, :]    # (1, 2*B_pad)
    mt = jnp.swapaxes(proj_matrix, 1, 2).reshape(R * D, D)   # stacked M[r].T

    total = 2 * B_pad
    TB = _pick_batch_tile(total, D)
    nt = total // TB

    dists = pl.pallas_call(
        transr_dist_kernel,
        out_shape=jax.ShapeDtypeStruct((1, total), jnp.float32),
        grid=(nt,),
        in_specs=[pl.BlockSpec((R * D, D), lambda i: (0, 0)),   # resident table
                  pl.BlockSpec((1, TB), lambda i: (0, i)),
                  pl.BlockSpec((D, TB), lambda i: (0, i)),
                  pl.BlockSpec((D, TB), lambda i: (0, i)),
                  pl.BlockSpec((D, TB), lambda i: (0, i))],
        out_specs=pl.BlockSpec((1, TB), lambda i: (0, i)),
        compiler_params=pltpu.CompilerParams(
            dimension_semantics=("parallel",)),
    )(mt, rid, h_e, t_e, r_e)

    d = dists[0]
    pos_d = d[:B]                       # padded lanes excluded from the loss
    neg_d = d[B_pad:B_pad + B]
    return jnp.sum(jnp.maximum(MARGIN + pos_d - neg_d, 0.0))


def transr_loss_ref(pos_triples, neg_triples, entity_emb, relation_emb, proj_matrix):
    h_pos, t_pos, r_pos = pos_triples[:, 0], pos_triples[:, 1], pos_triples[:, 2]
    h_neg, t_neg, r_neg = neg_triples[:, 0], neg_triples[:, 1], neg_triples[:, 2]
    hp, tp, rp, Mp = entity_emb[h_pos], entity_emb[t_pos], relation_emb[r_pos], proj_matrix[r_pos]
    hn, tn, rn, Mn = entity_emb[h_neg], entity_emb[t_neg], relation_emb[r_neg], proj_matrix[r_neg]
    hpp = jnp.einsum('bd,bde->be', hp, Mp)
    tpp = jnp.einsum('bd,bde->be', tp, Mp)
    hnp = jnp.einsum('bd,bde->be', hn, Mn)
    tnp = jnp.einsum('bd,bde->be', tn, Mn)
    pos_d = jnp.linalg.norm(hpp + rp - tpp, axis=1)
    neg_d = jnp.linalg.norm(hnp + rn - tnp, axis=1)
    return jnp.sum(jnp.maximum(MARGIN + pos_d - neg_d, 0.0))


def xavier_uniform(key, shape):
    # matches nn.init.xavier_uniform_ fan computation; deterministic synthetic init
    if len(shape) == 2:
        fan_in, fan_out = shape[0], shape[1]
    else:
        rf = 1
        for s in shape[2:]:
            rf *= s
        fan_in, fan_out = shape[1] * rf, shape[0] * rf
    bound = (6.0 / (fan_in + fan_out)) ** 0.5
    return jax.random.uniform(key, shape, jnp.float32, -bound, bound)


if __name__ == "__main__":
    num_entities, num_relations, embedding_dim, batch = 100, 10, 32, 8

    key = jax.random.PRNGKey(0)
    k_ent, k_rel, k_proj, k_idx = jax.random.split(key, 4)

    entity_emb = xavier_uniform(k_ent, (num_entities, embedding_dim))
    relation_emb = xavier_uniform(k_rel, (num_relations, embedding_dim))
    proj_matrix = xavier_uniform(k_proj, (num_relations, embedding_dim, embedding_dim))

    kh, kt, kr, khn, ktn, krn = jax.random.split(k_idx, 6)
    pos_triples = jnp.stack([
        jax.random.randint(kh, (batch,), 0, num_entities, jnp.int32),
        jax.random.randint(kt, (batch,), 0, num_entities, jnp.int32),
        jax.random.randint(kr, (batch,), 0, num_relations, jnp.int32),
    ], axis=1)
    neg_triples = jnp.stack([
        jax.random.randint(khn, (batch,), 0, num_entities, jnp.int32),
        jax.random.randint(ktn, (batch,), 0, num_entities, jnp.int32),
        jax.random.randint(krn, (batch,), 0, num_relations, jnp.int32),
    ], axis=1)

    loss = transr_loss(pos_triples, neg_triples, entity_emb, relation_emb, proj_matrix)
    loss = jax.block_until_ready(loss)

    loss_ref = transr_loss_ref(pos_triples, neg_triples, entity_emb, relation_emb, proj_matrix)
    assert jnp.allclose(loss, loss_ref, rtol=1e-4, atol=1e-4), (loss, loss_ref)

    print("KERNEL_OK")
</pallas_src>

<mosaic_0001>
module attributes {stable_mosaic.version = 11 : i64} {
  func.func @transr_dist_kernel(%arg0: i32, %arg1: memref<320x32xf32, #tpu.memory_space<vmem>>, %arg2: memref<1x128xi32, #tpu.memory_space<vmem>>, %arg3: memref<32x128xf32, #tpu.memory_space<vmem>>, %arg4: memref<32x128xf32, #tpu.memory_space<vmem>>, %arg5: memref<32x128xf32, #tpu.memory_space<vmem>>, %arg6: memref<1x128xf32, #tpu.memory_space<vmem>>) attributes {dimension_semantics = [#tpu.dimension_semantics<parallel>], iteration_bounds = array<i64: 2>, scalar_prefetch = 0 : i64, scratch_operands = 0 : i64, tpu.core_type = #tpu.core_type<tc>, window_params = [{pipeline_mode = #tpu.pipeline_mode<synchronous>, transform_indices = @transform_0, window_bounds = array<i64: 320, 32>}, {transform_indices = @transform_1, window_bounds = array<i64: 1, 128>}, {transform_indices = @transform_2, window_bounds = array<i64: 32, 128>}, {transform_indices = @transform_3, window_bounds = array<i64: 32, 128>}, {transform_indices = @transform_4, window_bounds = array<i64: 32, 128>}, {transform_indices = @transform_5, window_bounds = array<i64: 1, 128>}]} {
    %c0 = arith.constant 0 : index
    %c0_0 = arith.constant 0 : index
    %0 = vector.load %arg3[%c0, %c0_0] : memref<32x128xf32, #tpu.memory_space<vmem>>, vector<32x128xf32>
    %c0_1 = arith.constant 0 : index
    %c0_2 = arith.constant 0 : index
    %1 = vector.load %arg4[%c0_1, %c0_2] : memref<32x128xf32, #tpu.memory_space<vmem>>, vector<32x128xf32>
    %2 = arith.subf %0, %1 : vector<32x128xf32>
    %c0_3 = arith.constant 0 : index
    %c0_4 = arith.constant 0 : index
    %3 = vector.load %arg1[%c0_3, %c0_4] : memref<320x32xf32, #tpu.memory_space<vmem>>, vector<320x32xf32>
    %cst = arith.constant dense<0.000000e+00> : vector<320x128xf32>
    %4 = tpu.matmul %3, %2, %cst {dimension_numbers = #tpu.dot_dimension_numbers<[1], [0], [0], [1], [0, 0, 1, 1], [], []>} : vector<320x32xf32>, vector<32x128xf32>, vector<320x128xf32> -> vector<320x128xf32>
    %c0_5 = arith.constant 0 : index
    %c0_6 = arith.constant 0 : index
    %5 = vector.load %arg2[%c0_5, %c0_6] : memref<1x128xi32, #tpu.memory_space<vmem>>, vector<1x128xi32>
    %cst_7 = arith.constant 0.000000e+00 : f32
    %6 = vector.broadcast %cst_7 : f32 to vector<32x128xf32>
    %c0_i32 = arith.constant 0 : i32
    %7 = vector.broadcast %c0_i32 : i32 to vector<1x128xi32>
    %8 = arith.cmpi eq, %5, %7 : vector<1x128xi32>
    %9 = vector.extract_strided_slice %4 {offsets = [0, 0], sizes = [32, 128], strides = [1, 1]} : vector<320x128xf32> to vector<32x128xf32>
    %10 = vector.shape_cast %8 : vector<1x128xi1> to vector<1x128xi1>
    %11 = vector.broadcast %10 : vector<1x128xi1> to vector<32x128xi1>
    %12 = arith.select %11, %9, %6 : vector<32x128xi1>, vector<32x128xf32>
    %c1_i32 = arith.constant 1 : i32
    %13 = vector.broadcast %c1_i32 : i32 to vector<1x128xi32>
    %14 = arith.cmpi eq, %5, %13 : vector<1x128xi32>
    %15 = vector.extract_strided_slice %4 {offsets = [32, 0], sizes = [32, 128], strides = [1, 1]} : vector<320x128xf32> to vector<32x128xf32>
    %16 = vector.shape_cast %14 : vector<1x128xi1> to vector<1x128xi1>
    %17 = vector.broadcast %16 : vector<1x128xi1> to vector<32x128xi1>
    %18 = arith.select %17, %15, %12 : vector<32x128xi1>, vector<32x128xf32>
    %c2_i32 = arith.constant 2 : i32
    %19 = vector.broadcast %c2_i32 : i32 to vector<1x128xi32>
    %20 = arith.cmpi eq, %5, %19 : vector<1x128xi32>
    %21 = vector.extract_strided_slice %4 {offsets = [64, 0], sizes = [32, 128], strides = [1, 1]} : vector<320x128xf32> to vector<32x128xf32>
    %22 = vector.shape_cast %20 : vector<1x128xi1> to vector<1x128xi1>
    %23 = vector.broadcast %22 : vector<1x128xi1> to vector<32x128xi1>
    %24 = arith.select %23, %21, %18 : vector<32x128xi1>, vector<32x128xf32>
    %c3_i32 = arith.constant 3 : i32
    %25 = vector.broadcast %c3_i32 : i32 to vector<1x128xi32>
    %26 = arith.cmpi eq, %5, %25 : vector<1x128xi32>
    %27 = vector.extract_strided_slice %4 {offsets = [96, 0], sizes = [32, 128], strides = [1, 1]} : vector<320x128xf32> to vector<32x128xf32>
    %28 = vector.shape_cast %26 : vector<1x128xi1> to vector<1x128xi1>
    %29 = vector.broadcast %28 : vector<1x128xi1> to vector<32x128xi1>
    %30 = arith.select %29, %27, %24 : vector<32x128xi1>, vector<32x128xf32>
    %c4_i32 = arith.constant 4 : i32
    %31 = vector.broadcast %c4_i32 : i32 to vector<1x128xi32>
    %32 = arith.cmpi eq, %5, %31 : vector<1x128xi32>
    %33 = vector.extract_strided_slice %4 {offsets = [128, 0], sizes = [32, 128], strides = [1, 1]} : vector<320x128xf32> to vector<32x128xf32>
    %34 = vector.shape_cast %32 : vector<1x128xi1> to vector<1x128xi1>
    %35 = vector.broadcast %34 : vector<1x128xi1> to vector<32x128xi1>
    %36 = arith.select %35, %33, %30 : vector<32x128xi1>, vector<32x128xf32>
    %c5_i32 = arith.constant 5 : i32
    %37 = vector.broadcast %c5_i32 : i32 to vector<1x128xi32>
    %38 = arith.cmpi eq, %5, %37 : vector<1x128xi32>
    %39 = vector.extract_strided_slice %4 {offsets = [160, 0], sizes = [32, 128], strides = [1, 1]} : vector<320x128xf32> to vector<32x128xf32>
    %40 = vector.shape_cast %38 : vector<1x128xi1> to vector<1x128xi1>
    %41 = vector.broadcast %40 : vector<1x128xi1> to vector<32x128xi1>
    %42 = arith.select %41, %39, %36 : vector<32x128xi1>, vector<32x128xf32>
    %c6_i32 = arith.constant 6 : i32
    %43 = vector.broadcast %c6_i32 : i32 to vector<1x128xi32>
    %44 = arith.cmpi eq, %5, %43 : vector<1x128xi32>
    %45 = vector.extract_strided_slice %4 {offsets = [192, 0], sizes = [32, 128], strides = [1, 1]} : vector<320x128xf32> to vector<32x128xf32>
    %46 = vector.shape_cast %44 : vector<1x128xi1> to vector<1x128xi1>
    %47 = vector.broadcast %46 : vector<1x128xi1> to vector<32x128xi1>
    %48 = arith.select %47, %45, %42 : vector<32x128xi1>, vector<32x128xf32>
    %c7_i32 = arith.constant 7 : i32
    %49 = vector.broadcast %c7_i32 : i32 to vector<1x128xi32>
    %50 = arith.cmpi eq, %5, %49 : vector<1x128xi32>
    %51 = vector.extract_strided_slice %4 {offsets = [224, 0], sizes = [32, 128], strides = [1, 1]} : vector<320x128xf32> to vector<32x128xf32>
    %52 = vector.shape_cast %50 : vector<1x128xi1> to vector<1x128xi1>
    %53 = vector.broadcast %52 : vector<1x128xi1> to vector<32x128xi1>
    %54 = arith.select %53, %51, %48 : vector<32x128xi1>, vector<32x128xf32>
    %c8_i32 = arith.constant 8 : i32
    %55 = vector.broadcast %c8_i32 : i32 to vector<1x128xi32>
    %56 = arith.cmpi eq, %5, %55 : vector<1x128xi32>
    %57 = vector.extract_strided_slice %4 {offsets = [256, 0], sizes = [32, 128], strides = [1, 1]} : vector<320x128xf32> to vector<32x128xf32>
    %58 = vector.shape_cast %56 : vector<1x128xi1> to vector<1x128xi1>
    %59 = vector.broadcast %58 : vector<1x128xi1> to vector<32x128xi1>
    %60 = arith.select %59, %57, %54 : vector<32x128xi1>, vector<32x128xf32>
    %c9_i32 = arith.constant 9 : i32
    %61 = vector.broadcast %c9_i32 : i32 to vector<1x128xi32>
    %62 = arith.cmpi eq, %5, %61 : vector<1x128xi32>
    %63 = vector.extract_strided_slice %4 {offsets = [288, 0], sizes = [32, 128], strides = [1, 1]} : vector<320x128xf32> to vector<32x128xf32>
    %64 = vector.shape_cast %62 : vector<1x128xi1> to vector<1x128xi1>
    %65 = vector.broadcast %64 : vector<1x128xi1> to vector<32x128xi1>
    %66 = arith.select %65, %63, %60 : vector<32x128xi1>, vector<32x128xf32>
    %c0_8 = arith.constant 0 : index
    %c0_9 = arith.constant 0 : index
    %67 = vector.load %arg5[%c0_8, %c0_9] : memref<32x128xf32, #tpu.memory_space<vmem>>, vector<32x128xf32>
    %68 = arith.addf %66, %67 : vector<32x128xf32>
    %69 = arith.mulf %68, %68 : vector<32x128xf32>
    %cst_10 = arith.constant dense<0.000000e+00> : vector<128xf32>
    %70 = vector.multi_reduction <add>, %69, %cst_10 [0] : vector<32x128xf32> to vector<128xf32>
    %71 = vector.shape_cast %70 : vector<128xf32> to vector<1x128xf32>
    %72 = math.sqrt %71 : vector<1x128xf32>
    %c0_11 = arith.constant 0 : index
    %c0_12 = arith.constant 0 : index
    %73 = vector.load %arg6[%c0_11, %c0_12] : memref<1x128xf32, #tpu.memory_space<vmem>>, vector<1x128xf32>
    tpu.vector_store %arg6[%c0_11, %c0_12], %72 {strides = array<i32>} : memref<1x128xf32, #tpu.memory_space<vmem>>, vector<1x128xf32>,
    return
  }
  func.func @transform_0(%arg0: i32) -> (i32, i32) {
    %c0_i32 = arith.constant 0 : i32
    %c0_i32_0 = arith.constant 0 : i32
    %c0_i32_1 = arith.constant 0 : i32
    return %c0_i32, %c0_i32_0 : i32, i32
  }
  func.func @transform_1(%arg0: i32) -> (i32, i32) {
    %c0_i32 = arith.constant 0 : i32
    %c0_i32_0 = arith.constant 0 : i32
    return %c0_i32, %arg0 : i32, i32
  }
  func.func @transform_2(%arg0: i32) -> (i32, i32) {
    %c0_i32 = arith.constant 0 : i32
    %c0_i32_0 = arith.constant 0 : i32
    return %c0_i32, %arg0 : i32, i32
  }
  func.func @transform_3(%arg0: i32) -> (i32, i32) {
    %c0_i32 = arith.constant 0 : i32
    %c0_i32_0 = arith.constant 0 : i32
    return %c0_i32, %arg0 : i32, i32
  }
  func.func @transform_4(%arg0: i32) -> (i32, i32) {
    %c0_i32 = arith.constant 0 : i32
    %c0_i32_0 = arith.constant 0 : i32
    return %c0_i32, %arg0 : i32, i32
  }
  func.func @transform_5(%arg0: i32) -> (i32, i32) {
    %c0_i32 = arith.constant 0 : i32
    %c0_i32_0 = arith.constant 0 : i32
    return %c0_i32, %arg0 : i32, i32
  }
}

</mosaic_0001>

<llo_original>
// kernel: tpu_custom_call.1
$region0: #{tpu_custom_call.1}
  #allocation0 [shape = 'u32[]', space=smem, size = 0x4, offset = 0x4, fixed_abs, tag = 'smem constant byte address 0x4 - core index']
  #allocation1 [shape = 'u32[144,128]{1,0:T(1,128)}', space=vmem, size = 0x12000, scoped, tag = 'internal scratch']
  %s0 = inlined_call_operand.vmem [shape: f32[320,32], index: 0, kind: input, shape index: {}]
  %s1 = inlined_call_operand.vmem [shape: s32[1,256], index: 1, kind: input, shape index: {}]
  %s2 = inlined_call_operand.vmem [shape: f32[32,256], index: 2, kind: input, shape index: {}]
  %s3 = inlined_call_operand.vmem [shape: f32[32,256], index: 3, kind: input, shape index: {}]
  %s4 = inlined_call_operand.vmem [shape: f32[32,256], index: 4, kind: input, shape index: {}]
  %s5 = inlined_call_operand.hbm [shape: f32[1,256], index: 5, kind: output, shape index: {}]
  %s6 = sld [smem:[#allocation0]]
  $region167: #{tpu_custom_call.1} parent=0
    _
  %s8 = ssub.s32 1, %s6
  %s9 = scalar_select 0, %s8, %s6
  $region1: #{tpu_custom_call.1} parent=0
    #allocation2 [shape = 'u8[32768]{0}', space=vmem, size = 0x8000, scoped, tag = 'input window, operand 2']
    #allocation3 [shape = 'u8[32768]{0}', space=vmem, size = 0x8000, scoped, tag = 'input window, operand 3']
    #allocation4 [shape = 'u8[32768]{0}', space=vmem, size = 0x8000, scoped, tag = 'input window, operand 4']
    #allocation5 [shape = 'u8[1024]{0}', space=vmem, size = 0x400, scoped, tag = 'output window, operand 0']
    #allocation6 [shape = 's32[2]{0}', space=sflag, size = 0x8, scoped, tag = 'scoped memory for tpu_custom_call.1']
    %10 = vsyncpa [#allocation6], 0
    %s11 = scalar_lea.sflag [#allocation6], 1
    %12 = vsyncpa %s11, 0
    loop: start=0, step=1, limit=4
    $region2: #{tpu_custom_call.1} parent=1 // loop_pre_header
      _
    $region3: #{tpu_custom_call.1} parent=1 // loop_header
      %s14 = sphi 0, %s18
      %p15 = scmp.ge.s32.totalorder %s14, 4
      %s22 = sphi 0, %s22
      %s24 = sphi 0, %s22
      %s25 = sphi 0, %s24
      %s39 = sphi 0, %s25
      %s45 = sphi 0, %s47
      %s48 = sphi 0, %s45
      %s49 = sphi 0, %s48
      %s65 = sphi 0, %s49
      %s71 = sphi 0, %s73
      %s74 = sphi 0, %s71
      %s75 = sphi 0, %s74
      %s91 = sphi 0, %s75
      %s97 = sphi 0, %s99
      %s100 = sphi 0, %s97
      %s101 = sphi 0, %s100
      %s117 = sphi 0, %s101
      %s123 = sphi 0, %s125
      %s126 = sphi 0, %s123
      %s127 = sphi 0, %s126
      %s143 = sphi 0, %s127
      %s149 = sphi 0, %s151
      %s152 = sphi 0, %s149
      %s153 = sphi 0, %s152
      %s169 = sphi 0, %s153
    $region4: #{tpu_custom_call.1} parent=1 // loop_header_branch
      %17 = sbr.rel (%p15) target = $region8
    $region5: #{tpu_custom_call.1} parent=1 // loop_body
      %s19 = ssub.s32 %s14, 1
      %s20 = ssub.s32 %s14, 2
      %s21 = sadd.s32 %s14, 1
      %s23 = sadd.s32 %s22, 1
      %p26 = scmp.eq.s32.totalorder %s14, 1
      %p27 = scmp.ne.s32.totalorder %s22, %s24
      %p28 = scmp.eq.s32.totalorder %s14, 0
      %p29 = por %p27, %p28
      %p30 = scmp.ne.s32.totalorder %s22, %s24
      %p31 = scmp.eq.s32.totalorder %s19, 1
      %p32 = por %p30, %p31
      %p33 = scmp.ne.s32.totalorder %s24, %s25
      %p34 = scmp.eq.s32.totalorder %s19, 0
      %p35 = por %p33, %p34
      %p36 = scmp.ne.s32.totalorder %s24, %s25
      %p37 = scmp.eq.s32.totalorder %s20, 1
      %p38 = por %p36, %p37
      %p40 = scmp.ne.s32.totalorder %s25, %s39
      %p41 = scmp.eq.s32.totalorder %s20, 0
      %p42 = por %p40, %p41
      %s43 = ssub.s32 %s14, %s21
      %p44 = scmp.eq.s32.totalorder %s43, 0
      %s46 = sadd.s32 %s45, 1
      %s47 = scalar_select %p44, %s45, %s46
      %p50 = pneg %p44
      %p51 = scmp.eq.s32.totalorder %s14, 1
      %p52 = por %p50, %p51
      %p53 = scmp.ne.s32.totalorder %s45, %s48
      %p54 = scmp.eq.s32.totalorder %s14, 0
      %p55 = por %p53, %p54
      %p56 = scmp.ne.s32.totalorder %s45, %s48
      %p57 = scmp.eq.s32.totalorder %s19, 1
      %p58 = por %p56, %p57
      %p59 = scmp.ne.s32.totalorder %s48, %s49
      %p60 = scmp.eq.s32.totalorder %s19, 0
      %p61 = por %p59, %p60
      %p62 = scmp.ne.s32.totalorder %s48, %s49
      %p63 = scmp.eq.s32.totalorder %s20, 1
      %p64 = por %p62, %p63
      %p66 = scmp.ne.s32.totalorder %s49, %s65
      %p67 = scmp.eq.s32.totalorder %s20, 0
      %p68 = por %p66, %p67
      %s69 = ssub.s32 %s14, %s21
      %p70 = scmp.eq.s32.totalorder %s69, 0
      %s72 = sadd.s32 %s71, 1
      %s73 = scalar_select %p70, %s71, %s72
      %p76 = pneg %p70
      %p77 = scmp.eq.s32.totalorder %s14, 1
      %p78 = por %p76, %p77
      %p79 = scmp.ne.s32.totalorder %s71, %s74
      %p80 = scmp.eq.s32.totalorder %s14, 0
      %p81 = por %p79, %p80
      %p82 = scmp.ne.s32.totalorder %s71, %s74
      %p83 = scmp.eq.s32.totalorder %s19, 1
      %p84 = por %p82, %p83
      %p85 = scmp.ne.s32.totalorder %s74, %s75
      %p86 = scmp.eq.s32.totalorder %s19, 0
      %p87 = por %p85, %p86
      %p88 = scmp.ne.s32.totalorder %s74, %s75
      %p89 = scmp.eq.s32.totalorder %s20, 1
      %p90 = por %p88, %p89
      %p92 = scmp.ne.s32.totalorder %s75, %s91
      %p93 = scmp.eq.s32.totalorder %s20, 0
      %p94 = por %p92, %p93
      %s95 = ssub.s32 %s14, %s21
      %p96 = scmp.eq.s32.totalorder %s95, 0
      %s98 = sadd.s32 %s97, 1
      %s99 = scalar_select %p96, %s97, %s98
      %p102 = pneg %p96
      %p103 = scmp.eq.s32.totalorder %s14, 1
      %p104 = por %p102, %p103
      %p105 = scmp.ne.s32.totalorder %s97, %s100
      %p106 = scmp.eq.s32.totalorder %s14, 0
      %p107 = por %p105, %p106
      %p108 = scmp.ne.s32.totalorder %s97, %s100
      %p109 = scmp.eq.s32.totalorder %s19, 1
      %p110 = por %p108, %p109
      %p111 = scmp.ne.s32.totalorder %s100, %s101
      %p112 = scmp.eq.s32.totalorder %s19, 0
      %p113 = por %p111, %p112
      %p114 = scmp.ne.s32.totalorder %s100, %s101
      %p115 = scmp.eq.s32.totalorder %s20, 1
      %p116 = por %p114, %p115
      %p118 = scmp.ne.s32.totalorder %s101, %s117
      %p119 = scmp.eq.s32.totalorder %s20, 0
      %p120 = por %p118, %p119
      %s121 = ssub.s32 %s14, %s21
      %p122 = scmp.eq.s32.totalorder %s121, 0
      %s124 = sadd.s32 %s123, 1
      %s125 = scalar_select %p122, %s123, %s124
      %p128 = pneg %p122
      %p129 = scmp.eq.s32.totalorder %s14, 1
      %p130 = por %p128, %p129
      %p131 = scmp.ne.s32.totalorder %s123, %s126
      %p132 = scmp.eq.s32.totalorder %s14, 0
      %p133 = por %p131, %p132
      %p134 = scmp.ne.s32.totalorder %s123, %s126
      %p135 = scmp.eq.s32.totalorder %s19, 1
      %p136 = por %p134, %p135
      %p137 = scmp.ne.s32.totalorder %s126, %s127
      %p138 = scmp.eq.s32.totalorder %s19, 0
      %p139 = por %p137, %p138
      %p140 = scmp.ne.s32.totalorder %s126, %s127
      %p141 = scmp.eq.s32.totalorder %s20, 1
      %p142 = por %p140, %p141
      %p144 = scmp.ne.s32.totalorder %s127, %s143
      %p145 = scmp.eq.s32.totalorder %s20, 0
      %p146 = por %p144, %p145
      %s147 = ssub.s32 %s14, %s21
      %p148 = scmp.eq.s32.totalorder %s147, 0
      %s150 = sadd.s32 %s149, 1
      %s151 = scalar_select %p148, %s149, %s150
      %p154 = pneg %p148
      %p155 = scmp.eq.s32.totalorder %s14, 1
      %p156 = por %p154, %p155
      %p157 = scmp.ne.s32.totalorder %s149, %s152
      %p158 = scmp.eq.s32.totalorder %s14, 0
      %p159 = por %p157, %p158
      %p160 = scmp.ne.s32.totalorder %s149, %s152
      %p161 = scmp.eq.s32.totalorder %s19, 1
      %p162 = por %p160, %p161
      %p163 = scmp.ne.s32.totalorder %s152, %s153
      %p164 = scmp.eq.s32.totalorder %s19, 0
      %p165 = por %p163, %p164
      %p166 = scmp.ne.s32.totalorder %s152, %s153
      %p167 = scmp.eq.s32.totalorder %s20, 1
      %p168 = por %p166, %p167
      %p170 = scmp.ne.s32.totalorder %s153, %s169
      %p171 = scmp.eq.s32.totalorder %s20, 0
      %p172 = por %p170, %p171
      %p173 = scmp.le.s32.totalorder 1, %s14
      %p174 = scmp.lt.s32.totalorder %s14, 3
      %p175 = pnand %p173, %p174
      %p176 = pneg %p175
      // Predicated region
      $region9: #{tpu_custom_call.1} parent=5 // pred_check
        _
      $region10: #{tpu_custom_call.1} parent=5 // pred_check_branch
        %178 = sbr.rel (%p175) target = $region12
      $region11: #{tpu_custom_call.1} parent=5 // pred_region
        %s179 = ssub.s32 %s14, 1
        // Predicated region
        $region13: #{tpu_custom_call.1} parent=11 // pred_check
          %p180 = pneg %p35
        $region14: #{tpu_custom_call.1} parent=11 // pred_check_branch
          %182 = sbr.rel (%p180) target = $region16
        $region15: #{tpu_custom_call.1} parent=11 // pred_region
          _
        $region16: #{tpu_custom_call.1} parent=11 // pred_fallthru
          _
      $region12: #{tpu_custom_call.1} parent=5 // pred_fallthru
        _
      %p183 = scmp.lt.s32.totalorder %s14, 2
      // Predicated region
      $region17: #{tpu_custom_call.1} parent=5 // pred_check
        %p184 = pneg %p183
      $region18: #{tpu_custom_call.1} parent=5 // pred_check_branch
        %186 = sbr.rel (%p184) target = $region20
      $region19: #{tpu_custom_call.1} parent=5 // pred_region
        // Predicated region
        $region21: #{tpu_custom_call.1} parent=19 // pred_check
          %p187 = pneg %p55
        $region22: #{tpu_custom_call.1} parent=19 // pred_check_branch
          %189 = sbr.rel (%p187) target = $region24
        $region23: #{tpu_custom_call.1} parent=19 // pred_region
          %p190 = scmp.lt.s32.totalorder %s14, 1
          %s191 = scalar_select %p190, %s14, 1
          %s192 = scalar_lea.vmem %s1, %s191
        $region24: #{tpu_custom_call.1} parent=19 // pred_fallthru
          _
        // Predicated region
        $region25: #{tpu_custom_call.1} parent=19 // pred_check
          %p193 = pneg %p81
        $region26: #{tpu_custom_call.1} parent=19 // pred_check_branch
          %195 = sbr.rel (%p193) target = $region28
        $region27: #{tpu_custom_call.1} parent=19 // pred_region
          %s196 = sand.u32 %s71, 1
          %s197 = sand.u32 %s71, 1
          %s198 = smul.addr %s197, 32
          %s199 = scalar_lea.vmem [#allocation2], %s198
          %s200 = smul.addr %s14, 8
          %s201 = scalar_lea.vmem %s2, %s200
          // Predicated region
          $region29: #{tpu_custom_call.1} parent=27 // pred_check
            _
          $region30: #{tpu_custom_call.1} parent=27 // pred_check_branch
            %203 = sbr.rel (0) target = $region32
          $region31: #{tpu_custom_call.1} parent=27 // pred_region
            // Predicated region
            $region33: #{tpu_custom_call.1} parent=31 // pred_check
              _
            $region34: #{tpu_custom_call.1} parent=31 // pred_check_branch
              %205 = sbr.rel (0) target = $region36
            $region35: #{tpu_custom_call.1} parent=31 // pred_region
              // Predicated region
              $region48: #{tpu_custom_call.1} parent=35 // pred_check
                _
              $region49: #{tpu_custom_call.1} parent=35 // pred_check_branch
                %227 = sbr.rel (0) target = $region51
              $region50: #{tpu_custom_call.1} parent=35 // pred_region
                loop: start=0, step=1, limit=1
                $region52: #{tpu_custom_call.1} parent=50 // loop_pre_header
                  _
                $region53: #{tpu_custom_call.1} parent=50 // loop_header
                  %s229 = sphi 0, %s233
                  %p230 = scmp.ge.s32.totalorder %s229, 1
                  %s234 = sphi %s201, %s201
                  %s235 = sphi %s199, %s199
                $region54: #{tpu_custom_call.1} parent=50 // loop_header_branch
                  %232 = sbr.rel (%p230) target = $region58
                $region55: #{tpu_custom_call.1} parent=50 // loop_body
                  %v236 = vld [vmem:[%s234] sm:$0xff]
                  %237 = vst [vmem:[%s235] sm:$0xff] %v236
                  %v238 = vld [vmem:[%s234 + $0x10] sm:$0xff]
                  %239 = vst [vmem:[%s235 + $0x8] sm:$0xff] %v238
                  %v240 = vld [vmem:[%s234 + $0x20] sm:$0xff]
                  %241 = vst [vmem:[%s235 + $0x10] sm:$0xff] %v240
                  %v242 = vld [vmem:[%s234 + $0x30] sm:$0xff]
                  %243 = vst [vmem:[%s235 + $0x18] sm:$0xff] %v242
                $region56: #{tpu_custom_call.1} parent=50 // loop_footer
                  %s233 = sadd.s32 1, %s229
                $region57: #{tpu_custom_call.1} parent=50 // loop_footer_branch
                  %228 = sbr.rel target = $region53
                $region58: #{tpu_custom_call.1} parent=50 // loop_exit
                  _
              $region51: #{tpu_custom_call.1} parent=35 // pred_fallthru
                _
              // Predicated region
              $region59: #{tpu_custom_call.1} parent=35 // pred_check
                _
              $region60: #{tpu_custom_call.1} parent=35 // pred_check_branch
                %245 = sbr.rel target = $region62
              $region61: #{tpu_custom_call.1} parent=35 // pred_region
                _
              $region62: #{tpu_custom_call.1} parent=35 // pred_fallthru
                _
            $region36: #{tpu_custom_call.1} parent=31 // pred_fallthru
              _
            // Predicated region
            $region37: #{tpu_custom_call.1} parent=31 // pred_check
              _
            $region38: #{tpu_custom_call.1} parent=31 // pred_check_branch
              %207 = sbr.rel target = $region40
            $region39: #{tpu_custom_call.1} parent=31 // pred_region
              %s209 = ssub.s32 256, 1
              loop: start=0, step=1, limit=1
              $region41: #{tpu_custom_call.1} parent=39 // loop_pre_header
                _
              $region42: #{tpu_custom_call.1} parent=39 // loop_header
                %s211 = sphi 0, %s215
                %p212 = scmp.ge.s32.totalorder %s211, 1
                %s216 = sphi %s201, %s201
                %s217 = sphi %s199, %s199
              $region43: #{tpu_custom_call.1} parent=39 // loop_header_branch
                %214 = sbr.rel (%p212) target = $region47
              $region44: #{tpu_custom_call.1} parent=39 // loop_body
                %v218 = vld [vmem:[%s216] sm:%s209]
                %219 = vst [vmem:[%s217] sm:%s209] %v218
                %v220 = vld [vmem:[%s216 + $0x10] sm:%s209]
                %221 = vst [vmem:[%s217 + $0x8] sm:%s209] %v220
                %v222 = vld [vmem:[%s216 + $0x20] sm:%s209]
                %223 = vst [vmem:[%s217 + $0x10] sm:%s209] %v222
                %v224 = vld [vmem:[%s216 + $0x30] sm:%s209]
                %225 = vst [vmem:[%s217 + $0x18] sm:%s209] %v224
              $region45: #{tpu_custom_call.1} parent=39 // loop_footer
                %s215 = sadd.s32 1, %s211
              $region46: #{tpu_custom_call.1} parent=39 // loop_footer_branch
                %210 = sbr.rel target = $region42
              $region47: #{tpu_custom_call.1} parent=39 // loop_exit
                _
            $region40: #{tpu_custom_call.1} parent=31 // pred_fallthru
              _
          $region32: #{tpu_custom_call.1} parent=27 // pred_fallthru
            _
          %246 = vnop
        $region28: #{tpu_custom_call.1} parent=19 // pred_fallthru
          _
        // Predicated region
        $region63: #{tpu_custom_call.1} parent=19 // pred_check
          %p247 = pneg %p107
        $region64: #{tpu_custom_call.1} parent=19 // pred_check_branch
          %249 = sbr.rel (%p247) target = $region66
        $region65: #{tpu_custom_call.1} parent=19 // pred_region
          %s250 = sand.u32 %s97, 1
          %s251 = sand.u32 %s97, 1
          %s252 = smul.addr %s251, 32
          %s253 = scalar_lea.vmem [#allocation3], %s252
          %s254 = smul.addr %s14, 8
          %s255 = scalar_lea.vmem %s3, %s254
          // Predicated region
          $region67: #{tpu_custom_call.1} parent=65 // pred_check
            _
          $region68: #{tpu_custom_call.1} parent=65 // pred_check_branch
            %257 = sbr.rel (0) target = $region70
          $region69: #{tpu_custom_call.1} parent=65 // pred_region
            // Predicated region
            $region71: #{tpu_custom_call.1} parent=69 // pred_check
              _
            $region72: #{tpu_custom_call.1} parent=69 // pred_check_branch
              %259 = sbr.rel (0) target = $region74
            $region73: #{tpu_custom_call.1} parent=69 // pred_region
              // Predicated region
              $region86: #{tpu_custom_call.1} parent=73 // pred_check
                _
              $region87: #{tpu_custom_call.1} parent=73 // pred_check_branch
                %281 = sbr.rel (0) target = $region89
              $region88: #{tpu_custom_call.1} parent=73 // pred_region
                loop: start=0, step=1, limit=1
                $region90: #{tpu_custom_call.1} parent=88 // loop_pre_header
                  _
                $region91: #{tpu_custom_call.1} parent=88 // loop_header
                  %s283 = sphi 0, %s287
                  %p284 = scmp.ge.s32.totalorder %s283, 1
                  %s288 = sphi %s255, %s255
                  %s289 = sphi %s253, %s253
                $region92: #{tpu_custom_call.1} parent=88 // loop_header_branch
                  %286 = sbr.rel (%p284) target = $region96
                $region93: #{tpu_custom_call.1} parent=88 // loop_body
                  %v290 = vld [vmem:[%s288] sm:$0xff]
                  %291 = vst [vmem:[%s289] sm:$0xff] %v290
                  %v292 = vld [vmem:[%s288 + $0x10] sm:$0xff]
                  %293 = vst [vmem:[%s289 + $0x8] sm:$0xff] %v292
                  %v294 = vld [vmem:[%s288 + $0x20] sm:$0xff]
                  %295 = vst [vmem:[%s289 + $0x10] sm:$0xff] %v294
                  %v296 = vld [vmem:[%s288 + $0x30] sm:$0xff]
                  %297 = vst [vmem:[%s289 + $0x18] sm:$0xff] %v296
                $region94: #{tpu_custom_call.1} parent=88 // loop_footer
                  %s287 = sadd.s32 1, %s283
                $region95: #{tpu_custom_call.1} parent=88 // loop_footer_branch
                  %282 = sbr.rel target = $region91
                $region96: #{tpu_custom_call.1} parent=88 // loop_exit
                  _
              $region89: #{tpu_custom_call.1} parent=73 // pred_fallthru
                _
              // Predicated region
              $region97: #{tpu_custom_call.1} parent=73 // pred_check
                _
              $region98: #{tpu_custom_call.1} parent=73 // pred_check_branch
                %299 = sbr.rel target = $region100
              $region99: #{tpu_custom_call.1} parent=73 // pred_region
                _
              $region100: #{tpu_custom_call.1} parent=73 // pred_fallthru
                _
            $region74: #{tpu_custom_call.1} parent=69 // pred_fallthru
              _
            // Predicated region
            $region75: #{tpu_custom_call.1} parent=69 // pred_check
              _
            $region76: #{tpu_custom_call.1} parent=69 // pred_check_branch
              %261 = sbr.rel target = $region78
            $region77: #{tpu_custom_call.1} parent=69 // pred_region
              %s263 = ssub.s32 256, 1
              loop: start=0, step=1, limit=1
              $region79: #{tpu_custom_call.1} parent=77 // loop_pre_header
                _
              $region80: #{tpu_custom_call.1} parent=77 // loop_header
                %s265 = sphi 0, %s269
                %p266 = scmp.ge.s32.totalorder %s265, 1
                %s270 = sphi %s255, %s255
                %s271 = sphi %s253, %s253
              $region81: #{tpu_custom_call.1} parent=77 // loop_header_branch
                %268 = sbr.rel (%p266) target = $region85
              $region82: #{tpu_custom_call.1} parent=77 // loop_body
                %v272 = vld [vmem:[%s270] sm:%s263]
                %273 = vst [vmem:[%s271] sm:%s263] %v272
                %v274 = vld [vmem:[%s270 + $0x10] sm:%s263]
                %275 = vst [vmem:[%s271 + $0x8] sm:%s263] %v274
                %v276 = vld [vmem:[%s270 + $0x20] sm:%s263]
                %277 = vst [vmem:[%s271 + $0x10] sm:%s263] %v276
                %v278 = vld [vmem:[%s270 + $0x30] sm:%s263]
                %279 = vst [vmem:[%s271 + $0x18] sm:%s263] %v278
              $region83: #{tpu_custom_call.1} parent=77 // loop_footer
                %s269 = sadd.s32 1, %s265
              $region84: #{tpu_custom_call.1} parent=77 // loop_footer_branch
                %264 = sbr.rel target = $region80
              $region85: #{tpu_custom_call.1} parent=77 // loop_exit
                _
            $region78: #{tpu_custom_call.1} parent=69 // pred_fallthru
              _
          $region70: #{tpu_custom_call.1} parent=65 // pred_fallthru
            _
          %300 = vnop
        $region66: #{tpu_custom_call.1} parent=19 // pred_fallthru
          _
        // Predicated region
        $region101: #{tpu_custom_call.1} parent=19 // pred_check
          %p301 = pneg %p133
        $region102: #{tpu_custom_call.1} parent=19 // pred_check_branch
          %303 = sbr.rel (%p301) target = $region104
        $region103: #{tpu_custom_call.1} parent=19 // pred_region
          %s304 = sand.u32 %s123, 1
          %s305 = sand.u32 %s123, 1
          %s306 = smul.addr %s305, 32
          %s307 = scalar_lea.vmem [#allocation4], %s306
          %s308 = smul.addr %s14, 8
          %s309 = scalar_lea.vmem %s4, %s308
          // Predicated region
          $region105: #{tpu_custom_call.1} parent=103 // pred_check
            _
          $region106: #{tpu_custom_call.1} parent=103 // pred_check_branch
            %311 = sbr.rel (0) target = $region108
          $region107: #{tpu_custom_call.1} parent=103 // pred_region
            // Predicated region
            $region109: #{tpu_custom_call.1} parent=107 // pred_check
              _
            $region110: #{tpu_custom_call.1} parent=107 // pred_check_branch
              %313 = sbr.rel (0) target = $region112
            $region111: #{tpu_custom_call.1} parent=107 // pred_region
              // Predicated region
              $region124: #{tpu_custom_call.1} parent=111 // pred_check
                _
              $region125: #{tpu_custom_call.1} parent=111 // pred_check_branch
                %335 = sbr.rel (0) target = $region127
              $region126: #{tpu_custom_call.1} parent=111 // pred_region
                loop: start=0, step=1, limit=1
                $region128: #{tpu_custom_call.1} parent=126 // loop_pre_header
                  _
                $region129: #{tpu_custom_call.1} parent=126 // loop_header
                  %s337 = sphi 0, %s341
                  %p338 = scmp.ge.s32.totalorder %s337, 1
                  %s342 = sphi %s309, %s309
                  %s343 = sphi %s307, %s307
                $region130: #{tpu_custom_call.1} parent=126 // loop_header_branch
                  %340 = sbr.rel (%p338) target = $region134
                $region131: #{tpu_custom_call.1} parent=126 // loop_body
                  %v344 = vld [vmem:[%s342] sm:$0xff]
                  %345 = vst [vmem:[%s343] sm:$0xff] %v344
                  %v346 = vld [vmem:[%s342 + $0x10] sm:$0xff]
                  %347 = vst [vmem:[%s343 + $0x8] sm:$0xff] %v346
                  %v348 = vld [vmem:[%s342 + $0x20] sm:$0xff]
                  %349 = vst [vmem:[%s343 + $0x10] sm:$0xff] %v348
                  %v350 = vld [vmem:[%s342 + $0x30] sm:$0xff]
                  %351 = vst [vmem:[%s343 + $0x18] sm:$0xff] %v350
                $region132: #{tpu_custom_call.1} parent=126 // loop_footer
                  %s341 = sadd.s32 1, %s337
                $region133: #{tpu_custom_call.1} parent=126 // loop_footer_branch
                  %336 = sbr.rel target = $region129
                $region134: #{tpu_custom_call.1} parent=126 // loop_exit
                  _
              $region127: #{tpu_custom_call.1} parent=111 // pred_fallthru
                _
              // Predicated region
              $region135: #{tpu_custom_call.1} parent=111 // pred_check
                _
              $region136: #{tpu_custom_call.1} parent=111 // pred_check_branch
                %353 = sbr.rel target = $region138
              $region137: #{tpu_custom_call.1} parent=111 // pred_region
                _
              $region138: #{tpu_custom_call.1} parent=111 // pred_fallthru
                _
            $region112: #{tpu_custom_call.1} parent=107 // pred_fallthru
              _
            // Predicated region
            $region113: #{tpu_custom_call.1} parent=107 // pred_check
              _
            $region114: #{tpu_custom_call.1} parent=107 // pred_check_branch
              %315 = sbr.rel target = $region116
            $region115: #{tpu_custom_call.1} parent=107 // pred_region
              %s317 = ssub.s32 256, 1
              loop: start=0, step=1, limit=1
              $region117: #{tpu_custom_call.1} parent=115 // loop_pre_header
                _
              $region118: #{tpu_custom_call.1} parent=115 // loop_header
                %s319 = sphi 0, %s323
                %p320 = scmp.ge.s32.totalorder %s319, 1
                %s324 = sphi %s309, %s309
                %s325 = sphi %s307, %s307
              $region119: #{tpu_custom_call.1} parent=115 // loop_header_branch
                %322 = sbr.rel (%p320) target = $region123
              $region120: #{tpu_custom_call.1} parent=115 // loop_body
                %v326 = vld [vmem:[%s324] sm:%s317]
                %327 = vst [vmem:[%s325] sm:%s317] %v326
                %v328 = vld [vmem:[%s324 + $0x10] sm:%s317]
                %329 = vst [vmem:[%s325 + $0x8] sm:%s317] %v328
                %v330 = vld [vmem:[%s324 + $0x20] sm:%s317]
                %331 = vst [vmem:[%s325 + $0x10] sm:%s317] %v330
                %v332 = vld [vmem:[%s324 + $0x30] sm:%s317]
                %333 = vst [vmem:[%s325 + $0x18] sm:%s317] %v332
              $region121: #{tpu_custom_call.1} parent=115 // loop_footer
                %s323 = sadd.s32 1, %s319
              $region122: #{tpu_custom_call.1} parent=115 // loop_footer_branch
                %318 = sbr.rel target = $region118
              $region123: #{tpu_custom_call.1} parent=115 // loop_exit
                _
            $region116: #{tpu_custom_call.1} parent=107 // pred_fallthru
              _
          $region108: #{tpu_custom_call.1} parent=103 // pred_fallthru
            _
          %354 = vnop
        $region104: #{tpu_custom_call.1} parent=19 // pred_fallthru
          _
      $region20: #{tpu_custom_call.1} parent=5 // pred_fallthru
        _
      %p355 = scmp.le.s32.totalorder 1, %s14
      %p356 = scmp.lt.s32.totalorder %s14, 3
      %p357 = pnand %p355, %p356
      %p358 = pneg %p357
      // Predicated region
      $region139: #{tpu_custom_call.1} parent=5 // pred_check
        _
      $region140: #{tpu_custom_call.1} parent=5 // pred_check_branch
        %360 = sbr.rel (%p357) target = $region142
      $region141: #{tpu_custom_call.1} parent=5 // pred_region
        %s361 = ssub.s32 %s14, 1
        %s362 = sand.u32 %s74, 1
        %s363 = sand.u32 %s74, 1
        %s364 = smul.addr %s363, 32
        %s365 = scalar_lea.vmem [#allocation2], %s364
        // Predicated region
        $region143: #{tpu_custom_call.1} parent=141 // pred_check
          %p366 = pneg %p87
        $region144: #{tpu_custom_call.1} parent=141 // pred_check_branch
          %368 = sbr.rel (%p366) target = $region146
        $region145: #{tpu_custom_call.1} parent=141 // pred_region
          _
        $region146: #{tpu_custom_call.1} parent=141 // pred_fallthru
          _
        %s369 = sand.u32 %s100, 1
        %s370 = sand.u32 %s100, 1
        %s371 = smul.addr %s370, 32
        %s372 = scalar_lea.vmem [#allocation3], %s371
        // Predicated region
        $region147: #{tpu_custom_call.1} parent=141 // pred_check
          %p373 = pneg %p113
        $region148: #{tpu_custom_call.1} parent=141 // pred_check_branch
          %375 = sbr.rel (%p373) target = $region150
        $region149: #{tpu_custom_call.1} parent=141 // pred_region
          _
        $region150: #{tpu_custom_call.1} parent=141 // pred_fallthru
          _
        %s376 = sand.u32 %s126, 1
        %s377 = sand.u32 %s126, 1
        %s378 = smul.addr %s377, 32
        %s379 = scalar_lea.vmem [#allocation4], %s378
        // Predicated region
        $region151: #{tpu_custom_call.1} parent=141 // pred_check
          %p380 = pneg %p139
        $region152: #{tpu_custom_call.1} parent=141 // pred_check_branch
          %382 = sbr.rel (%p380) target = $region154
        $region153: #{tpu_custom_call.1} parent=141 // pred_region
          _
        $region154: #{tpu_custom_call.1} parent=141 // pred_fallthru
          _
        %p383 = pneg %p35
        %p384 = pneg %p32
        %p385 = scmp.lt.s32.totalorder %s19, 1
        %s386 = scalar_select %p385, %s19, 1
        %s387 = scalar_lea.vmem %s1, %s386
        %p388 = pneg %p61
        %p389 = pneg %p58
        %s390 = sand.u32 %s74, 1
        %s391 = sand.u32 %s74, 1
        %s392 = smul.addr %s391, 32
        %s393 = scalar_lea.vmem [#allocation2], %s392
        %p394 = pneg %p87
        %p395 = pneg %p84
        %s396 = sand.u32 %s100, 1
        %s397 = sand.u32 %s100, 1
        %s398 = smul.addr %s397, 32
        %s399 = scalar_lea.vmem [#allocation3], %s398
        %p400 = pneg %p113
        %p401 = pneg %p110
        %s402 = sand.u32 %s126, 1
        %s403 = sand.u32 %s126, 1
        %s404 = smul.addr %s403, 32
        %s405 = scalar_lea.vmem [#allocation4], %s404
        %p406 = pneg %p139
        %p407 = pneg %p136
        %p408 = pneg %p165
        %p409 = pneg %p162
        %s410 = sand.u32 %s152, 1
        %s411 = scalar_lea.sflag [#allocation6], %s410
        %s412 = sand.u32 %s152, 1
        %s413 = scalar_lea.vmem [#allocation5], %s412
        %p414 = scmp.lt.s32.totalorder %s19, 1
        %s415 = scalar_select %p414, %s19, 1
        %s416 = scalar_lea.vmem %s1, %s415
        %v417 = vld [vmem:[%s365] sm:$0xff]
        %v418 = vld [vmem:[%s365 + $0x8] sm:$0xff]
        %v419 = vld [vmem:[%s365 + $0x10] sm:$0xff]
        %v420 = vld [vmem:[%s365 + $0x18] sm:$0xff]
        %v421 = vld [vmem:[%s372] sm:$0xff]
        %v422 = vld [vmem:[%s372 + $0x8] sm:$0xff]
        %v423 = vld [vmem:[%s372 + $0x10] sm:$0xff]
        %v424 = vld [vmem:[%s372 + $0x18] sm:$0xff]
        %v425 = vsub.f32 %v417, %v421
        %v426 = vsub.f32 %v418, %v422
        %v427 = vsub.f32 %v419, %v423
        %v428 = vsub.f32 %v420, %v424
        %v429 = vld [vmem:[%s0] sm:$0xff]
        %v430 = vld [vmem:[%s0 + $0x8] sm:$0xff]
        %v431 = vld [vmem:[%s0 + $0x10] sm:$0xff]
        %v432 = vld [vmem:[%s0 + $0x18] sm:$0xff]
        %v433 = vld [vmem:[%s0 + $0x20] sm:$0xff]
        %v434 = vld [vmem:[%s0 + $0x28] sm:$0xff]
        %v435 = vld [vmem:[%s0 + $0x30] sm:$0xff]
        %v436 = vld [vmem:[%s0 + $0x38] sm:$0xff]
        %v437 = vld [vmem:[%s0 + $0x40] sm:$0xff]
        %v438 = vld [vmem:[%s0 + $0x48] sm:$0xff]
        %v439 = vld [vmem:[%s0 + $0x50] sm:$0xff]
        %v440 = vld [vmem:[%s0 + $0x58] sm:$0xff]
        %v441 = vld [vmem:[%s0 + $0x60] sm:$0xff]
        %v442 = vld [vmem:[%s0 + $0x68] sm:$0xff]
        %v443 = vld [vmem:[%s0 + $0x70] sm:$0xff]
        %v444 = vld [vmem:[%s0 + $0x78] sm:$0xff]
        %v445 = vld [vmem:[%s0 + $0x80] sm:$0xff]
        %v446 = vld [vmem:[%s0 + $0x88] sm:$0xff]
        %v447 = vld [vmem:[%s0 + $0x90] sm:$0xff]
        %v448 = vld [vmem:[%s0 + $0x98] sm:$0xff]
        %v449 = vld [vmem:[%s0 + $0xa0] sm:$0xff]
        %v450 = vld [vmem:[%s0 + $0xa8] sm:$0xff]
        %v451 = vld [vmem:[%s0 + $0xb0] sm:$0xff]
        %v452 = vld [vmem:[%s0 + $0xb8] sm:$0xff]
        %v453 = vld [vmem:[%s0 + $0xc0] sm:$0xff]
        %v454 = vld [vmem:[%s0 + $0xc8] sm:$0xff]
        %v455 = vld [vmem:[%s0 + $0xd0] sm:$0xff]
        %v456 = vld [vmem:[%s0 + $0xd8] sm:$0xff]
        %v457 = vld [vmem:[%s0 + $0xe0] sm:$0xff]
        %v458 = vld [vmem:[%s0 + $0xe8] sm:$0xff]
        %v459 = vld [vmem:[%s0 + $0xf0] sm:$0xff]
        %v460 = vld [vmem:[%s0 + $0xf8] sm:$0xff]
        %v461 = vld [vmem:[%s0 + $0x100] sm:$0xff]
        %v462 = vld [vmem:[%s0 + $0x108] sm:$0xff]
        %v463 = vld [vmem:[%s0 + $0x110] sm:$0xff]
        %v464 = vld [vmem:[%s0 + $0x118] sm:$0xff]
        %v465 = vld [vmem:[%s0 + $0x120] sm:$0xff]
        %v466 = vld [vmem:[%s0 + $0x128] sm:$0xff]
        %v467 = vld [vmem:[%s0 + $0x130] sm:$0xff]
        %v468 = vld [vmem:[%s0 + $0x138] sm:$0xff]
        %vm469 = vcmask 261120
        %v471 = vsel %vm469, %v429, 0
        %v474 = vsel %vm469, %v430, 0
        %v477 = vsel %vm469, %v431, 0
        %v480 = vsel %vm469, %v432, 0
        %v483 = vsel %vm469, %v433, 0
        %v486 = vsel %vm469, %v434, 0
        %v489 = vsel %vm469, %v435, 0
        %v492 = vsel %vm469, %v436, 0
        %v495 = vsel %vm469, %v437, 0
        %v498 = vsel %vm469, %v438, 0
        %v501 = vsel %vm469, %v439, 0
        %v504 = vsel %vm469, %v440, 0
        %v507 = vsel %vm469, %v441, 0
        %v510 = vsel %vm469, %v442, 0
        %v513 = vsel %vm469, %v443, 0
        %v516 = vsel %vm469, %v444, 0
        %v519 = vsel %vm469, %v445, 0
        %v522 = vsel %vm469, %v446, 0
        %v525 = vsel %vm469, %v447, 0
        %v528 = vsel %vm469, %v448, 0
        %v531 = vsel %vm469, %v449, 0
        %v534 = vsel %vm469, %v450, 0
        %v537 = vsel %vm469, %v451, 0
        %v540 = vsel %vm469, %v452, 0
        %v543 = vsel %vm469, %v453, 0
        %v546 = vsel %vm469, %v454, 0
        %v549 = vsel %vm469, %v455, 0
        %v552 = vsel %vm469, %v456, 0
        %v555 = vsel %vm469, %v457, 0
        %v558 = vsel %vm469, %v458, 0
        %v561 = vsel %vm469, %v459, 0
        %v564 = vsel %vm469, %v460, 0
        %v567 = vsel %vm469, %v461, 0
        %v570 = vsel %vm469, %v462, 0
        %v573 = vsel %vm469, %v463, 0
        %v576 = vsel %vm469, %v464, 0
        %v579 = vsel %vm469, %v465, 0
        %v582 = vsel %vm469, %v466, 0
        %v585 = vsel %vm469, %v467, 0
        %v588 = vsel %vm469, %v468, 0
        %590 = vmatprep.subr.mxu0 0.0
        %591 = vmatpush1.msra.mxu0 0.0
        %592 = vmatprep.subr.mxu0 0.0
        %593 = vmatpush1.msra.mxu0 0.0
        %594 = vmatprep.subr.mxu0 0.0
        %595 = vmatpush1.msra.mxu0 0.0
        %596 = vmatprep.subr.mxu0 0.0
        %597 = vmatpush1.msra.mxu0 0.0
        %598 = vmatprep.subr.mxu0 0.0
        %599 = vmatpush1.msra.mxu0 0.0
        %600 = vmatprep.subr.mxu0 0.0
        %601 = vmatpush1.msra.mxu0 0.0
        %602 = vmatprep.subr.mxu0 0.0
        %603 = vmatpush1.msra.mxu0 0.0
        %604 = vmatprep.subr.mxu0 0.0
        %605 = vmatpush1.msra.mxu0 0.0
        %606 = vmatprep.subr.mxu0 0.0
        %607 = vmatpush1.msra.mxu0 0.0
        %608 = vmatprep.subr.mxu0 0.0
        %609 = vmatpush1.msra.mxu0 0.0
        %610 = vmatprep.subr.mxu0 0.0
        %611 = vmatpush1.msra.mxu0 0.0
        %612 = vmatprep.subr.mxu0 0.0
        %613 = vmatpush1.msra.mxu0 0.0
        %614 = vmatprep.subr.mxu0 0.0
        %615 = vmatpush1.msra.mxu0 %v428
        %616 = vmatprep.subr.mxu0 0.0
        %617 = vmatpush1.msra.mxu0 %v427
        %618 = vmatprep.subr.mxu0 0.0
        %619 = vmatpush1.msra.mxu0 %v426
        %620 = vmatprep.subr.mxu0 0.0
        %621 = vmatpush1.msra.mxu0 %v425
        %622 = vmatprep.subr.mxu0 0.0
        %623 = vmatpush2.msra.mxu0 0.0
        %624 = vmatprep.subr.mxu0 0.0
        %625 = vmatpush2.msra.mxu0 0.0
        %626 = vmatprep.subr.mxu0 0.0
        %627 = vmatpush2.msra.mxu0 0.0
        %628 = vmatprep.subr.mxu0 0.0
        %629 = vmatpush2.msra.mxu0 0.0
        %630 = vmatprep.subr.mxu0 0.0
        %631 = vmatpush2.msra.mxu0 0.0
        %632 = vmatprep.subr.mxu0 0.0
        %633 = vmatpush2.msra.mxu0 0.0
        %634 = vmatprep.subr.mxu0 0.0
        %635 = vmatpush2.msra.mxu0 0.0
        %636 = vmatprep.subr.mxu0 0.0
        %637 = vmatpush2.msra.mxu0 0.0
        %638 = vmatprep.subr.mxu0 0.0
        %639 = vmatpush2.msra.mxu0 0.0
        %640 = vmatprep.subr.mxu0 0.0
        %641 = vmatpush2.msra.mxu0 0.0
        %642 = vmatprep.subr.mxu0 0.0
        %643 = vmatpush2.msra.mxu0 0.0
        %644 = vmatprep.subr.mxu0 0.0
        %645 = vmatpush2.msra.mxu0 0.0
        %646 = vmatprep.subr.mxu0 0.0
        %647 = vmatpush2.msra.mxu0 0.0
        %648 = vmatprep.subr.mxu0 0.0
        %649 = vmatpush2.msra.mxu0 0.0
        %650 = vmatprep.subr.mxu0 0.0
        %651 = vmatpush2.msra.mxu0 0.0
        %652 = vmatprep.subr.mxu0 0.0
        %653 = vmatpush2.msra.mxu0 0.0
        %654 = vmatprep.mubr.f32.mxu0 0.0
        %655 = vmatmul.mubr.f32.gmra.mxu0 %v471
        %v656 = vpop.f32.mrf.mxu0
        %v657 = vadd.f32 0.0, %v656
        %v658 = vpop.f32.mrf.mxu0
        %659 = vmatprep.mubr.f32.mxu0 0.0
        %660 = vmatmul.mubr.f32.gmra.mxu0 %v474
        %v661 = vpop.f32.mrf.mxu0
        %v662 = vadd.f32 0.0, %v661
        %v663 = vpop.f32.mrf.mxu0
        %664 = vmatprep.mubr.f32.mxu0 0.0
        %665 = vmatmul.mubr.f32.gmra.mxu0 %v477
        %v666 = vpop.f32.mrf.mxu0
        %v667 = vadd.f32 0.0, %v666
        %v668 = vpop.f32.mrf.mxu0
        %669 = vmatprep.mubr.f32.mxu0 0.0
        %670 = vmatmul.mubr.f32.gmra.mxu0 %v480
        %v671 = vpop.f32.mrf.mxu0
        %v672 = vadd.f32 0.0, %v671
        %v673 = vpop.f32.mrf.mxu0
        %674 = vmatprep.mubr.f32.mxu0 0.0
        %675 = vmatmul.mubr.f32.gmra.mxu0 %v483
        %v676 = vpop.f32.mrf.mxu0
        %v677 = vadd.f32 0.0, %v676
        %v678 = vpop.f32.mrf.mxu0
        %679 = vmatprep.mubr.f32.mxu0 0.0
        %680 = vmatmul.mubr.f32.gmra.mxu0 %v486
        %v681 = vpop.f32.mrf.mxu0
        %v682 = vadd.f32 0.0, %v681
        %v683 = vpop.f32.mrf.mxu0
        %684 = vmatprep.mubr.f32.mxu0 0.0
        %685 = vmatmul.mubr.f32.gmra.mxu0 %v489
        %v686 = vpop.f32.mrf.mxu0
        %v687 = vadd.f32 0.0, %v686
        %v688 = vpop.f32.mrf.mxu0
        %689 = vmatprep.mubr.f32.mxu0 0.0
        %690 = vmatmul.mubr.f32.gmra.mxu0 %v492
        %v691 = vpop.f32.mrf.mxu0
        %v692 = vadd.f32 0.0, %v691
        %v693 = vpop.f32.mrf.mxu0
        %694 = vmatprep.mubr.f32.mxu0 0.0
        %695 = vmatmul.mubr.f32.gmra.mxu0 %v495
        %v696 = vpop.f32.mrf.mxu0
        %v697 = vadd.f32 0.0, %v696
        %v698 = vpop.f32.mrf.mxu0
        %699 = vmatprep.mubr.f32.mxu0 0.0
        %700 = vmatmul.mubr.f32.gmra.mxu0 %v498
        %v701 = vpop.f32.mrf.mxu0
        %v702 = vadd.f32 0.0, %v701
        %v703 = vpop.f32.mrf.mxu0
        %704 = vmatprep.mubr.f32.mxu0 0.0
        %705 = vmatmul.mubr.f32.gmra.mxu0 %v501
        %v706 = vpop.f32.mrf.mxu0
        %v707 = vadd.f32 0.0, %v706
        %v708 = vpop.f32.mrf.mxu0
        %709 = vmatprep.mubr.f32.mxu0 0.0
        %710 = vmatmul.mubr.f32.gmra.mxu0 %v504
        %v711 = vpop.f32.mrf.mxu0
        %v712 = vadd.f32 0.0, %v711
        %v713 = vpop.f32.mrf.mxu0
        %714 = vmatprep.mubr.f32.mxu0 0.0
        %715 = vmatmul.mubr.f32.gmra.mxu0 %v507
        %v716 = vpop.f32.mrf.mxu0
        %v717 = vadd.f32 0.0, %v716
        %v718 = vpop.f32.mrf.mxu0
        %719 = vmatprep.mubr.f32.mxu0 0.0
        %720 = vmatmul.mubr.f32.gmra.mxu0 %v510
        %v721 = vpop.f32.mrf.mxu0
        %v722 = vadd.f32 0.0, %v721
        %v723 = vpop.f32.mrf.mxu0
        %724 = vmatprep.mubr.f32.mxu0 0.0
        %725 = vmatmul.mubr.f32.gmra.mxu0 %v513
        %v726 = vpop.f32.mrf.mxu0
        %v727 = vadd.f32 0.0, %v726
        %v728 = vpop.f32.mrf.mxu0
        %729 = vmatprep.mubr.f32.mxu0 0.0
        %730 = vmatmul.mubr.f32.gmra.mxu0 %v516
        %v731 = vpop.f32.mrf.mxu0
        %v732 = vadd.f32 0.0, %v731
        %v733 = vpop.f32.mrf.mxu0
        %734 = vmatprep.mubr.f32.mxu0 0.0
        %735 = vmatmul.mubr.f32.gmra.mxu0 %v519
        %v736 = vpop.f32.mrf.mxu0
        %v737 = vadd.f32 0.0, %v736
        %v738 = vpop.f32.mrf.mxu0
        %739 = vmatprep.mubr.f32.mxu0 0.0
        %740 = vmatmul.mubr.f32.gmra.mxu0 %v522
        %v741 = vpop.f32.mrf.mxu0
        %v742 = vadd.f32 0.0, %v741
        %v743 = vpop.f32.mrf.mxu0
        %744 = vmatprep.mubr.f32.mxu0 0.0
        %745 = vmatmul.mubr.f32.gmra.mxu0 %v525
        %v746 = vpop.f32.mrf.mxu0
        %v747 = vadd.f32 0.0, %v746
        %v748 = vpop.f32.mrf.mxu0
        %749 = vmatprep.mubr.f32.mxu0 0.0
        %750 = vmatmul.mubr.f32.gmra.mxu0 %v528
        %v751 = vpop.f32.mrf.mxu0
        %v752 = vadd.f32 0.0, %v751
        %v753 = vpop.f32.mrf.mxu0
        %754 = vmatprep.mubr.f32.mxu0 0.0
        %755 = vmatmul.mubr.f32.gmra.mxu0 %v531
        %v756 = vpop.f32.mrf.mxu0
        %v757 = vadd.f32 0.0, %v756
        %v758 = vpop.f32.mrf.mxu0
        %759 = vmatprep.mubr.f32.mxu0 0.0
        %760 = vmatmul.mubr.f32.gmra.mxu0 %v534
        %v761 = vpop.f32.mrf.mxu0
        %v762 = vadd.f32 0.0, %v761
        %v763 = vpop.f32.mrf.mxu0
        %764 = vmatprep.mubr.f32.mxu0 0.0
        %765 = vmatmul.mubr.f32.gmra.mxu0 %v537
        %v766 = vpop.f32.mrf.mxu0
        %v767 = vadd.f32 0.0, %v766
        %v768 = vpop.f32.mrf.mxu0
        %769 = vmatprep.mubr.f32.mxu0 0.0
        %770 = vmatmul.mubr.f32.gmra.mxu0 %v540
        %v771 = vpop.f32.mrf.mxu0
        %v772 = vadd.f32 0.0, %v771
        %v773 = vpop.f32.mrf.mxu0
        %774 = vmatprep.mubr.f32.mxu0 0.0
        %775 = vmatmul.mubr.f32.gmra.mxu0 %v543
        %v776 = vpop.f32.mrf.mxu0
        %v777 = vadd.f32 0.0, %v776
        %v778 = vpop.f32.mrf.mxu0
        %779 = vmatprep.mubr.f32.mxu0 0.0
        %780 = vmatmul.mubr.f32.gmra.mxu0 %v546
        %v781 = vpop.f32.mrf.mxu0
        %v782 = vadd.f32 0.0, %v781
        %v783 = vpop.f32.mrf.mxu0
        %784 = vmatprep.mubr.f32.mxu0 0.0
        %785 = vmatmul.mubr.f32.gmra.mxu0 %v549
        %v786 = vpop.f32.mrf.mxu0
        %v787 = vadd.f32 0.0, %v786
        %v788 = vpop.f32.mrf.mxu0
        %789 = vmatprep.mubr.f32.mxu0 0.0
        %790 = vmatmul.mubr.f32.gmra.mxu0 %v552
        %v791 = vpop.f32.mrf.mxu0
        %v792 = vadd.f32 0.0, %v791
        %v793 = vpop.f32.mrf.mxu0
        %794 = vmatprep.mubr.f32.mxu0 0.0
        %795 = vmatmul.mubr.f32.gmra.mxu0 %v555
        %v796 = vpop.f32.mrf.mxu0
        %v797 = vadd.f32 0.0, %v796
        %v798 = vpop.f32.mrf.mxu0
        %799 = vmatprep.mubr.f32.mxu0 0.0
        %800 = vmatmul.mubr.f32.gmra.mxu0 %v558
        %v801 = vpop.f32.mrf.mxu0
        %v802 = vadd.f32 0.0, %v801
        %v803 = vpop.f32.mrf.mxu0
        %804 = vmatprep.mubr.f32.mxu0 0.0
        %805 = vmatmul.mubr.f32.gmra.mxu0 %v561
        %v806 = vpop.f32.mrf.mxu0
        %v807 = vadd.f32 0.0, %v806
        %v808 = vpop.f32.mrf.mxu0
        %809 = vmatprep.mubr.f32.mxu0 0.0
        %810 = vmatmul.mubr.f32.gmra.mxu0 %v564
        %v811 = vpop.f32.mrf.mxu0
        %v812 = vadd.f32 0.0, %v811
        %v813 = vpop.f32.mrf.mxu0
        %814 = vmatprep.mubr.f32.mxu0 0.0
        %815 = vmatmul.mubr.f32.gmra.mxu0 %v567
        %v816 = vpop.f32.mrf.mxu0
        %v817 = vadd.f32 0.0, %v816
        %v818 = vpop.f32.mrf.mxu0
        %819 = vmatprep.mubr.f32.mxu0 0.0
        %820 = vmatmul.mubr.f32.gmra.mxu0 %v570
        %v821 = vpop.f32.mrf.mxu0
        %v822 = vadd.f32 0.0, %v821
        %v823 = vpop.f32.mrf.mxu0
        %824 = vmatprep.mubr.f32.mxu0 0.0
        %825 = vmatmul.mubr.f32.gmra.mxu0 %v573
        %v826 = vpop.f32.mrf.mxu0
        %v827 = vadd.f32 0.0, %v826
        %v828 = vpop.f32.mrf.mxu0
        %829 = vmatprep.mubr.f32.mxu0 0.0
        %830 = vmatmul.mubr.f32.gmra.mxu0 %v576
        %v831 = vpop.f32.mrf.mxu0
        %v832 = vadd.f32 0.0, %v831
        %v833 = vpop.f32.mrf.mxu0
        %834 = vmatprep.mubr.f32.mxu0 0.0
        %835 = vmatmul.mubr.f32.gmra.mxu0 %v579
        %v836 = vpop.f32.mrf.mxu0
        %v837 = vadd.f32 0.0, %v836
        %v838 = vpop.f32.mrf.mxu0
        %839 = vmatprep.mubr.f32.mxu0 0.0
        %840 = vmatmul.mubr.f32.gmra.mxu0 %v582
        %v841 = vpop.f32.mrf.mxu0
        %v842 = vadd.f32 0.0, %v841
        %v843 = vpop.f32.mrf.mxu0
        %844 = vmatprep.mubr.f32.mxu0 0.0
        %845 = vmatmul.mubr.f32.gmra.mxu0 %v585
        %v846 = vpop.f32.mrf.mxu0
        %v847 = vadd.f32 0.0, %v846
        %v848 = vpop.f32.mrf.mxu0
        %849 = vmatprep.mubr.f32.mxu0 0.0
        %850 = vmatmul.mubr.f32.gmra.mxu0 %v588
        %v851 = vpop.f32.mrf.mxu0
        %v852 = vadd.f32 0.0, %v851
        %v853 = vpop.f32.mrf.mxu0
        %854 = vdwg.mxu0
        %v855 = vld [vmem:[%s416] sm:$0x1]
        %vm856 = vcmp.eq.s32.totalorder %v855, 0
        %v857 = vsel %vm856, 1, 0
        %v858 = vlaneseq
        %v859 = vshrl.u32 %v858, 7
        %v860 = vsub.s32 0, %v859
        %v861 = vrot.slane %v857, %v860
        %vm862 = vcmp.eq.s32.totalorder %v861, 1
        %v863 = vsel %vm862, %v657, 0.0
        %v864 = vsel %vm862, %v662, 0.0
        %v865 = vsel %vm862, %v667, 0.0
        %v866 = vsel %vm862, %v672, 0.0
        %vm867 = vcmp.eq.s32.totalorder %v855, 1
        %v868 = vsel %vm867, 1, 0
        %v869 = vlaneseq
        %v870 = vshrl.u32 %v869, 7
        %v871 = vsub.s32 0, %v870
        %v872 = vrot.slane %v868, %v871
        %vm873 = vcmp.eq.s32.totalorder %v872, 1
        %v874 = vsel %vm873, %v677, %v863
        %v875 = vsel %vm873, %v682, %v864
        %v876 = vsel %vm873, %v687, %v865
        %v877 = vsel %vm873, %v692, %v866
        %vm878 = vcmp.eq.s32.totalorder %v855, 2
        %v879 = vsel %vm878, 1, 0
        %v880 = vlaneseq
        %v881 = vshrl.u32 %v880, 7
        %v882 = vsub.s32 0, %v881
        %v883 = vrot.slane %v879, %v882
        %vm884 = vcmp.eq.s32.totalorder %v883, 1
        %v885 = vsel %vm884, %v697, %v874
        %v886 = vsel %vm884, %v702, %v875
        %v887 = vsel %vm884, %v707, %v876
        %v888 = vsel %vm884, %v712, %v877
        %vm889 = vcmp.eq.s32.totalorder %v855, 3
        %v890 = vsel %vm889, 1, 0
        %v891 = vlaneseq
        %v892 = vshrl.u32 %v891, 7
        %v893 = vsub.s32 0, %v892
        %v894 = vrot.slane %v890, %v893
        %vm895 = vcmp.eq.s32.totalorder %v894, 1
        %v896 = vsel %vm895, %v717, %v885
        %v897 = vsel %vm895, %v722, %v886
        %v898 = vsel %vm895, %v727, %v887
        %v899 = vsel %vm895, %v732, %v888
        %vm900 = vcmp.eq.s32.totalorder %v855, 4
        %v901 = vsel %vm900, 1, 0
        %v902 = vlaneseq
        %v903 = vshrl.u32 %v902, 7
        %v904 = vsub.s32 0, %v903
        %v905 = vrot.slane %v901, %v904
        %vm906 = vcmp.eq.s32.totalorder %v905, 1
        %v907 = vsel %vm906, %v737, %v896
        %v908 = vsel %vm906, %v742, %v897
        %v909 = vsel %vm906, %v747, %v898
        %v910 = vsel %vm906, %v752, %v899
        %vm911 = vcmp.eq.s32.totalorder %v855, 5
        %v912 = vsel %vm911, 1, 0
        %v913 = vlaneseq
        %v914 = vshrl.u32 %v913, 7
        %v915 = vsub.s32 0, %v914
        %v916 = vrot.slane %v912, %v915
        %vm917 = vcmp.eq.s32.totalorder %v916, 1
        %v918 = vsel %vm917, %v757, %v907
        %v919 = vsel %vm917, %v762, %v908
        %v920 = vsel %vm917, %v767, %v909
        %v921 = vsel %vm917, %v772, %v910
        %vm922 = vcmp.eq.s32.totalorder %v855, 6
        %v923 = vsel %vm922, 1, 0
        %v924 = vlaneseq
        %v925 = vshrl.u32 %v924, 7
        %v926 = vsub.s32 0, %v925
        %v927 = vrot.slane %v923, %v926
        %vm928 = vcmp.eq.s32.totalorder %v927, 1
        %v929 = vsel %vm928, %v777, %v918
        %v930 = vsel %vm928, %v782, %v919
        %v931 = vsel %vm928, %v787, %v920
        %v932 = vsel %vm928, %v792, %v921
        %vm933 = vcmp.eq.s32.totalorder %v855, 7
        %v934 = vsel %vm933, 1, 0
        %v935 = vlaneseq
        %v936 = vshrl.u32 %v935, 7
        %v937 = vsub.s32 0, %v936
        %v938 = vrot.slane %v934, %v937
        %vm939 = vcmp.eq.s32.totalorder %v938, 1
        %v940 = vsel %vm939, %v797, %v929
        %v941 = vsel %vm939, %v802, %v930
        %v942 = vsel %vm939, %v807, %v931
        %v943 = vsel %vm939, %v812, %v932
        %vm944 = vcmp.eq.s32.totalorder %v855, 8
        %v945 = vsel %vm944, 1, 0
        %v946 = vlaneseq
        %v947 = vshrl.u32 %v946, 7
        %v948 = vsub.s32 0, %v947
        %v949 = vrot.slane %v945, %v948
        %vm950 = vcmp.eq.s32.totalorder %v949, 1
        %v951 = vsel %vm950, %v817, %v940
        %v952 = vsel %vm950, %v822, %v941
        %v953 = vsel %vm950, %v827, %v942
        %v954 = vsel %vm950, %v832, %v943
        %vm955 = vcmp.eq.s32.totalorder %v855, 9
        %v956 = vsel %vm955, 1, 0
        %v957 = vlaneseq
        %v958 = vshrl.u32 %v957, 7
        %v959 = vsub.s32 0, %v958
        %v960 = vrot.slane %v956, %v959
        %vm961 = vcmp.eq.s32.totalorder %v960, 1
        %v962 = vsel %vm961, %v837, %v951
        %v963 = vsel %vm961, %v842, %v952
        %v964 = vsel %vm961, %v847, %v953
        %v965 = vsel %vm961, %v852, %v954
        %v966 = vld [vmem:[%s379] sm:$0xff]
        %v967 = vld [vmem:[%s379 + $0x8] sm:$0xff]
        %v968 = vld [vmem:[%s379 + $0x10] sm:$0xff]
        %v969 = vld [vmem:[%s379 + $0x18] sm:$0xff]
        %v970 = vadd.f32 %v962, %v966
        %v971 = vadd.f32 %v963, %v967
        %v972 = vadd.f32 %v964, %v968
        %v973 = vadd.f32 %v965, %v969
        %v974 = vmul.f32 %v970, %v970
        %v975 = vmul.f32 %v971, %v971
        %v976 = vmul.f32 %v972, %v972
        %v977 = vmul.f32 %v973, %v973
        %v978 = vadd.f32 %v974, %v975
        %v979 = vadd.f32 %v978, %v976
        %v980 = vadd.f32 %v979, %v977
        %v981 = vrot.slane %v980, 4
        %v982 = vadd.f32 %v980, %v981
        %v983 = vrot.slane %v982, 2
        %v984 = vadd.f32 %v982, %v983
        %v985 = vrot.slane %v984, 1
        %v986 = vadd.f32 %v984, %v985
        %v987 = vrsqrt.pop %v986
        %v988 = vmul.f32 %v986, %v987
        %vm989 = vcmp.eq.f32.partialorder %v986, inf
        %v990 = vsel %vm989, %v986, %v988
        %vm991 = vcmp.eq.f32.partialorder %v986, 0.0
        %v992 = vand.u32 %v986, 2147483648
        %v993 = vsel %vm991, %v992, %v990
        %994 = vst [vmem:[%s413] sm:$0x1] %v993
        %s995 = sand.u32 %s152, 1
        %s996 = scalar_lea.sflag [#allocation6], %s995
        %s997 = sand.u32 %s152, 1
        %s998 = scalar_lea.vmem [#allocation5], %s997
        // Predicated region
        $region155: #{tpu_custom_call.1} parent=141 // pred_check
          %p999 = pneg %p162
        $region156: #{tpu_custom_call.1} parent=141 // pred_check_branch
          %1001 = sbr.rel (%p999) target = $region158
        $region157: #{tpu_custom_call.1} parent=141 // pred_region
          %s1003 = ssub.s32 16, 16
          %1004 = vsyncadd %s996, %s1003
          %s1005 = smul.addr %s19, 16
          %s1006 = scalar_lea.hbm %s5, %s1005
          %s1008 = sshll.u32 %s998, 4
          %s1009 = int_to_ptr.vmem [resolvable:$true] %s1008
          %1011 = dma.vmem_to_hbm [thread:$0]  %s1009, 16, %s1006, %s996
        $region158: #{tpu_custom_call.1} parent=141 // pred_fallthru
          _
      $region142: #{tpu_custom_call.1} parent=5 // pred_fallthru
        _
      %p1012 = scmp.le.s32.totalorder 2, %s14
      // Predicated region
      $region159: #{tpu_custom_call.1} parent=5 // pred_check
        %p1013 = pneg %p1012
      $region160: #{tpu_custom_call.1} parent=5 // pred_check_branch
        %1015 = sbr.rel (%p1013) target = $region162
      $region161: #{tpu_custom_call.1} parent=5 // pred_region
        %s1016 = ssub.s32 %s14, 2
        // Predicated region
        $region163: #{tpu_custom_call.1} parent=161 // pred_check
          %p1017 = pneg %p168
        $region164: #{tpu_custom_call.1} parent=161 // pred_check_branch
          %1019 = sbr.rel (%p1017) target = $region166
        $region165: #{tpu_custom_call.1} parent=161 // pred_region
          %s1020 = sand.u32 %s153, 1
          %s1021 = scalar_lea.sflag [#allocation6], %s1020
          %s1022 = sand.u32 %s153, 1
          %s1023 = scalar_lea.vmem [#allocation5], %s1022
          %1024 = dma.done %s1021, 16
        $region166: #{tpu_custom_call.1} parent=161 // pred_fallthru
          _
      $region162: #{tpu_custom_call.1} parent=5 // pred_fallthru
        _
    $region6: #{tpu_custom_call.1} parent=1 // loop_footer
      %s18 = sadd.s32 1, %s14
    $region7: #{tpu_custom_call.1} parent=1 // loop_footer_branch
      %13 = sbr.rel target = $region3
    $region8: #{tpu_custom_call.1} parent=1 // loop_exit
      _
    %1025 = vsyncpa [#allocation6], 1
    %s1026 = scalar_lea.sflag [#allocation6], 1
    %1027 = vsyncpa %s1026, 1

</llo_original>
